<compile_context>
chip_gen: v6e
topology: v6e:2x2x1
jax: 0.10.0
libtpu: 0.0.40
codegen_flags: <defaults>
</compile_context>

<pallas_src>
import functools

import jax
import jax.numpy as jnp
from jax.experimental import pallas as pl
from jax.experimental.pallas import tpu as pltpu


def _offset_flow_kernel(x_ref, loc_ref, y_ref, *, forward):
    # Hot path: broadcasted elementwise add/sub on the VPU.
    x = x_ref[...]        # (TB, d_eff)
    loc = loc_ref[...]    # (1, d_eff) -> broadcasts over sublanes
    if forward:
        y_ref[...] = x + loc
    else:
        y_ref[...] = x - loc


def _choose_block_rows(b_eff, d_eff, itemsize, target_bytes=2 << 20):
    """Pick a row-block size of roughly `target_bytes`, multiple of 8."""
    rows = (target_bytes // max(1, d_eff * itemsize)) // 8 * 8
    rows = max(8, rows)
    if rows >= b_eff:
        # Single whole-array block (legal even if b_eff is not a multiple
        # of 8, because the block equals the full array extent).
        return b_eff
    return rows


def offset_flow(x, loc, mode="forward"):
    """Pallas implementation of OffsetFlow.forward.

    Args:
      x:    (B, d) float input.
      loc:  (1, d) float offset parameter.
      mode: 'forward' -> y = loc + x ;  anything else -> x = y - loc.

    Returns:
      (out, logdet) with out shape (B, d) and logdet shape (B,) of zeros.
    """
    B, d = x.shape
    assert loc.shape == (1, d)
    forward = (mode == "forward")

    # --- lane-dense packing: fold k batch rows into one 128-wide lane row ---
    k = 1
    if d < 128 and (128 % d == 0) and (B % (128 // d) == 0):
        k = 128 // d
    b_eff = B // k
    d_eff = d * k
    if k > 1:
        x_in = x.reshape(b_eff, d_eff)
        loc_in = jnp.tile(loc, (1, k))
    else:
        x_in = x
        loc_in = loc

    itemsize = jnp.dtype(x.dtype).itemsize
    tb = _choose_block_rows(b_eff, d_eff, itemsize)
    grid = (pl.cdiv(b_eff, tb),)

    kernel = functools.partial(_offset_flow_kernel, forward=forward)

    out = pl.pallas_call(
        kernel,
        out_shape=jax.ShapeDtypeStruct((b_eff, d_eff), x.dtype),
        grid_spec=pltpu.PrefetchScalarGridSpec(
            num_scalar_prefetch=0,
            grid=grid,
            in_specs=[
                pl.BlockSpec((tb, d_eff), lambda i: (i, 0)),
                pl.BlockSpec((1, d_eff), lambda i: (0, 0)),
            ],
            out_specs=pl.BlockSpec((tb, d_eff), lambda i: (i, 0)),
        ),
        compiler_params=pltpu.CompilerParams(
            dimension_semantics=("parallel",)
        ),
    )(x_in, loc_in)

    if k > 1:
        out = out.reshape(B, d)

    # log-determinant of a pure translation is identically zero; produce it
    # in the wrapper instead of wasting an output DMA stream in the kernel.
    logdet = jnp.zeros((B,), x.dtype)
    return out, logdet


if __name__ == "__main__":
    # Module dims: OffsetFlow(d).  Small shapes: batch=8, d=32.
    B, d = 8, 32

    key = jax.random.PRNGKey(0)
    kx, kloc = jax.random.split(key)
    x = jax.random.normal(kx, (B, d), dtype=jnp.float32)
    # PyTorch inits loc to zeros; use a small nonzero deterministic value so
    # the add is actually exercised.
    loc = 0.1 * jax.random.normal(kloc, (1, d), dtype=jnp.float32)

    # Forward pass.
    y, logdet = offset_flow(x, loc, mode="forward")
    jax.block_until_ready((y, logdet))

    # Reverse pass (inverse) to check round-trip semantics.
    x_rec, inv_logdet = offset_flow(y, loc, mode="reverse")
    jax.block_until_ready((x_rec, inv_logdet))

    # Reference checks against plain JAX.
    assert jnp.allclose(y, x + loc, atol=1e-6)
    assert jnp.allclose(logdet, jnp.zeros((B,), jnp.float32))
    assert jnp.allclose(x_rec, x, atol=1e-6)
    assert jnp.allclose(inv_logdet, jnp.zeros((B,), jnp.float32))
    assert logdet.shape == (B,)

    print("KERNEL_OK")
</pallas_src>

<mosaic_0001>
module attributes {stable_mosaic.version = 11 : i64} {
  func.func @_offset_flow_kernel(%arg0: i32, %arg1: memref<2x128xf32, #tpu.memory_space<vmem>>, %arg2: memref<1x128xf32, #tpu.memory_space<vmem>>, %arg3: memref<2x128xf32, #tpu.memory_space<vmem>>) attributes {dimension_semantics = [#tpu.dimension_semantics<parallel>], iteration_bounds = array<i64: 1>, scalar_prefetch = 0 : i64, scratch_operands = 0 : i64, tpu.core_type = #tpu.core_type<tc>, window_params = [{transform_indices = @transform_0, window_bounds = array<i64: 2, 128>}, {pipeline_mode = #tpu.pipeline_mode<synchronous>, transform_indices = @transform_1, window_bounds = array<i64: 1, 128>}, {transform_indices = @transform_2, window_bounds = array<i64: 2, 128>}]} {
    %c0 = arith.constant 0 : index
    %c0_0 = arith.constant 0 : index
    %0 = vector.load %arg1[%c0, %c0_0] : memref<2x128xf32, #tpu.memory_space<vmem>>, vector<2x128xf32>
    %c0_1 = arith.constant 0 : index
    %c0_2 = arith.constant 0 : index
    %1 = vector.load %arg2[%c0_1, %c0_2] : memref<1x128xf32, #tpu.memory_space<vmem>>, vector<1x128xf32>
    %2 = vector.broadcast %1 : vector<1x128xf32> to vector<2x128xf32>
    %3 = arith.addf %0, %2 : vector<2x128xf32>
    %c0_3 = arith.constant 0 : index
    %c0_4 = arith.constant 0 : index
    %4 = vector.load %arg3[%c0_3, %c0_4] : memref<2x128xf32, #tpu.memory_space<vmem>>, vector<2x128xf32>
    tpu.vector_store %arg3[%c0_3, %c0_4], %3 {strides = array<i32>} : memref<2x128xf32, #tpu.memory_space<vmem>>, vector<2x128xf32>,
    return
  }
  func.func @transform_0(%arg0: i32) -> (i32, i32) {
    %c0_i32 = arith.constant 0 : i32
    %c0_i32_0 = arith.constant 0 : i32
    return %arg0, %c0_i32 : i32, i32
  }
  func.func @transform_1(%arg0: i32) -> (i32, i32) {
    %c0_i32 = arith.constant 0 : i32
    %c0_i32_0 = arith.constant 0 : i32
    %c0_i32_1 = arith.constant 0 : i32
    return %c0_i32, %c0_i32_0 : i32, i32
  }
  func.func @transform_2(%arg0: i32) -> (i32, i32) {
    %c0_i32 = arith.constant 0 : i32
    %c0_i32_0 = arith.constant 0 : i32
    return %arg0, %c0_i32 : i32, i32
  }
}

</mosaic_0001>

<llo_original>
// kernel: tpu_custom_call.1
$region0: #{tpu_custom_call.1}
  #allocation0 [shape = 'u32[]', space=smem, size = 0x4, offset = 0x4, fixed_abs, tag = 'smem constant byte address 0x4 - core index']
  #allocation1 [shape = 'u32[144,128]{1,0:T(1,128)}', space=vmem, size = 0x12000, scoped, tag = 'internal scratch']
  %s0 = inlined_call_operand.hbm [shape: f32[2,128], index: 0, kind: input, shape index: {}]
  %s1 = inlined_call_operand.vmem [shape: f32[1,128], index: 1, kind: input, shape index: {}]
  %s2 = inlined_call_operand.hbm [shape: f32[2,128], index: 2, kind: output, shape index: {}]
  %s3 = sld [smem:[#allocation0]]
  $region22: #{tpu_custom_call.1} parent=0
    _
  %s5 = ssub.s32 1, %s3
  %s6 = scalar_select 0, %s5, %s3
  $region1: #{tpu_custom_call.1} parent=0
    #allocation2 [shape = 'u8[1024]{0}', space=vmem, size = 0x400, scoped, tag = 'input window, operand 0, single buffered']
    #allocation3 [shape = 's32[1]{0}', space=sflag, size = 0x4, scoped, tag = 'scoped memory for tpu_custom_call.1']
    #allocation4 [shape = 's32[1]{0}', space=sflag, size = 0x4, scoped, tag = 'scoped memory for tpu_custom_call.1']
    #allocation5 [shape = 'u8[1024]{0}', space=vmem, size = 0x400, scoped, tag = 'output window, operand 0, single buffered']
    %7 = vsyncpa [#allocation3], 0
    %8 = vsyncpa [#allocation4], 0
    // Predicated region
    $region2: #{tpu_custom_call.1} parent=1 // pred_check
      _
    $region3: #{tpu_custom_call.1} parent=1 // pred_check_branch
      %10 = sbr.rel (0) target = $region5
    $region4: #{tpu_custom_call.1} parent=1 // pred_region
      %s12 = ssub.s32 32, 32
      %13 = vsyncadd [#allocation3], %s12
      %s15 = sshll.u32 [#allocation2], 4
      %s16 = int_to_ptr.vmem [resolvable:$true] %s15
      %18 = dma.hbm_to_vmem [thread:$0]  %s0, 32, %s16, [#allocation3]
    $region5: #{tpu_custom_call.1} parent=1 // pred_fallthru
      _
    // Predicated region
    $region6: #{tpu_custom_call.1} parent=1 // pred_check
      _
    $region7: #{tpu_custom_call.1} parent=1 // pred_check_branch
      %20 = sbr.rel (0) target = $region9
    $region8: #{tpu_custom_call.1} parent=1 // pred_region
      _
    $region9: #{tpu_custom_call.1} parent=1 // pred_fallthru
      _
    // Predicated region
    $region10: #{tpu_custom_call.1} parent=1 // pred_check
      _
    $region11: #{tpu_custom_call.1} parent=1 // pred_check_branch
      %22 = sbr.rel (0) target = $region13
    $region12: #{tpu_custom_call.1} parent=1 // pred_region
      %23 = dma.done [#allocation3], 32
    $region13: #{tpu_custom_call.1} parent=1 // pred_fallthru
      _
    %v24 = vld [vmem:[#allocation2] sm:$0x3]
    %v25 = vld [vmem:[%s1] sm:$0x1]
    %v27 = vlaneseq
    %v28 = vshrl.u32 %v27, 7
    %v29 = vsub.s32 0, %v28
    %v30 = vrot.slane %v25, %v29
    %v32 = vadd.f32 %v24, %v30
    %33 = vst [vmem:[#allocation5] sm:$0x3] %v32
    // Predicated region
    $region14: #{tpu_custom_call.1} parent=1 // pred_check
      _
    $region15: #{tpu_custom_call.1} parent=1 // pred_check_branch
      %35 = sbr.rel (0) target = $region17
    $region16: #{tpu_custom_call.1} parent=1 // pred_region
      %s37 = ssub.s32 32, 32
      %38 = vsyncadd [#allocation4], %s37
      %s40 = sshll.u32 [#allocation5], 4
      %s41 = int_to_ptr.vmem [resolvable:$true] %s40
      %43 = dma.vmem_to_hbm [thread:$0]  %s41, 32, %s2, [#allocation4]
    $region17: #{tpu_custom_call.1} parent=1 // pred_fallthru
      _
    // Predicated region
    $region18: #{tpu_custom_call.1} parent=1 // pred_check
      _
    $region19: #{tpu_custom_call.1} parent=1 // pred_check_branch
      %45 = sbr.rel (0) target = $region21
    $region20: #{tpu_custom_call.1} parent=1 // pred_region
      %46 = dma.done [#allocation4], 32
    $region21: #{tpu_custom_call.1} parent=1 // pred_fallthru
      _
    %47 = vsyncpa [#allocation3], 1
    %48 = vsyncpa [#allocation4], 1

</llo_original>
